<compile_context>
chip_gen: v7x
topology: tpu7x:2x2x1
jax: 0.10.0
libtpu: 0.0.40
codegen_flags: <defaults>
</compile_context>

<pallas_src>
import functools

import jax
import jax.numpy as jnp
import numpy as np
from jax import lax
from jax.experimental import pallas as pl
from jax.experimental.pallas import tpu as pltpu


def _round_up(v, m):
    return ((v + m - 1) // m) * m


def _vmem_capacity_bytes():
    try:
        return int(pltpu.get_tpu_info().vmem_capacity_bytes)
    except Exception:
        return 64 << 20          # conservative fallback (v7x floor)


def _pick_row_tile(n_rows, cap, step):
    """Largest divisor of n_rows that is a multiple of `step` and <= cap."""
    cap = max(step, min(cap, n_rows))
    best = step
    d = step
    while d <= cap:
        if n_rows % d == 0:
            best = d
        d += step
    return best


def _pick_tile_fitting(n_rows, cap, step, per_row_bytes, fixed_bytes, budget):
    tm = _pick_row_tile(n_rows, cap, step)
    while tm > step and fixed_bytes + per_row_bytes * tm > budget:
        tm = _pick_row_tile(n_rows, tm - step, step)
    return tm


# ----------------------------------------------------------------------------
# Plain-JAX glue: normalized Laplacian + largest eigenvalue (power iteration).
# ----------------------------------------------------------------------------
def create_graph_lapl_norm(a):
    """l_norm = D^-1/2 (A + I) D^-1/2 ; also returns the degree vector."""
    n = a.shape[-1]
    a = a + jnp.eye(n, dtype=a.dtype)
    deg = a.sum(axis=-1)
    d_inv_sqrt = lax.rsqrt(deg)
    return (a * d_inv_sqrt[:, None]) * d_inv_sqrt[None, :], deg


def _largest_eigval(l_norm, deg, iters=16):
    """Dominant eigenvalue via power iteration + Rayleigh quotient.

    For D^-1/2 (A + I) D^-1/2 the Perron pair is (1, D^1/2 1); that vector is
    the initial guess, so the standard symmetric case is exact immediately.
    O(iters * N^2) instead of O(N^3) dense eig.
    """
    v = jnp.sqrt(deg)
    v = v / jnp.maximum(jnp.linalg.norm(v), 1e-30)

    def body(_, v):
        w = l_norm @ v
        return w / jnp.maximum(jnp.linalg.norm(w), 1e-30)

    v = lax.fori_loop(0, iters, body, v)
    return jnp.vdot(v, l_norm @ v) / jnp.vdot(v, v)


# ----------------------------------------------------------------------------
# Path A: fully fused single kernel (recursion + projection + aggregation).
# L is read once and never leaves VMEM; Chebyshev features never touch HBM.
# ----------------------------------------------------------------------------
def _make_fused_kernel(order):
    def kernel(inv2_ref, l_ref, x_ref, w_ref, b_ref, out_ref):
        # inv2_ref: SMEM f32[1]                 2 / eigmax (unused if order==1)
        # l_ref   : VMEM mdt [Np, Np]           normalized laplacian
        # x_ref   : VMEM f32 [Np, Fp]
        # w_ref   : VMEM mdt [order, Fp, Op]    theta-folded, reordered weights
        # b_ref   : VMEM f32 [1, Op]
        # out_ref : VMEM f32 [Np, Op]
        l = l_ref[...]
        mdt = l.dtype
        t0 = x_ref[...]                                     # f32 recursion state
        acc = jnp.dot(t0.astype(mdt), w_ref[0],
                      preferred_element_type=jnp.float32)
        if order > 1:
            inv2 = inv2_ref[0]
            # T_1 = l_res @ T_0 = (2/eigmax) * (L @ T_0) - T_0
            t1 = inv2 * jnp.dot(l, t0.astype(mdt),
                                preferred_element_type=jnp.float32) - t0
            acc = acc + jnp.dot(t1.astype(mdt), w_ref[1],
                                preferred_element_type=jnp.float32)
            for k in range(2, order):
                # T_k = 2 * l_res @ T_{k-1} - T_{k-2}
                lt = inv2 * jnp.dot(l, t1.astype(mdt),
                                    preferred_element_type=jnp.float32) - t1
                t2 = 2.0 * lt - t0
                acc = acc + jnp.dot(t2.astype(mdt), w_ref[k],
                                    preferred_element_type=jnp.float32)
                t0, t1 = t1, t2
        acc = acc + b_ref[...]
        # Fused aggregation: out = L @ (y @ W + b), no HBM round trip for acc.
        out_ref[...] = jnp.dot(l, acc.astype(mdt),
                               preferred_element_type=jnp.float32
                               ).astype(out_ref.dtype)
    return kernel


# ----------------------------------------------------------------------------
# Path B1: row-tiled Chebyshev recursion + theta-folded projection.
# grid = (order, row_tiles): k (recursion step, outer) x i (row tile).
# The T slab is resident VMEM scratch in the MXU dtype; row tiles share it
# across k steps, so both axes must be "arbitrary" (megacore cores do not
# share scratch).
# ----------------------------------------------------------------------------
def _make_cheb_proj_kernel(order, tm, o_pad):
    def kernel(inv2_ref, l_ref, x_ref, w_ref, b_ref, acc_ref, slab_ref):
        k = pl.program_id(0)
        i = pl.program_id(1)
        row = pl.multiple_of(i * tm, tm)
        mdt = w_ref.dtype

        @pl.when(k == 0)
        def _():
            # T_0 = x   (full-lane store: F is padded to a multiple of 128)
            slab_ref[0, pl.ds(row, tm), :] = x_ref[...].astype(mdt)

        @pl.when(k > 0)
        def _():
            # T_k[rows] = c * ((2/eigmax) * L[rows,:] @ T_{k-1} - T_{k-1}[rows])
            #             - [k>=2] * T_{k-2}[rows],   c = 1 if k==1 else 2
            inv2 = inv2_ref[0]
            t_prev_full = slab_ref[k - 1]                         # [Np, Fp]
            t_prev_rows = slab_ref[k - 1, pl.ds(row, tm), :].astype(jnp.float32)
            lt = inv2 * jnp.dot(l_ref[...], t_prev_full,
                                preferred_element_type=jnp.float32) - t_prev_rows
            t_pp_rows = slab_ref[jnp.maximum(k - 2, 0),
                                 pl.ds(row, tm), :].astype(jnp.float32)
            t_new = jnp.where(k == 1, lt, 2.0 * lt - t_pp_rows)
            slab_ref[k, pl.ds(row, tm), :] = t_new.astype(mdt)

        @pl.when(k == order - 1)
        def _():
            # Slab row block complete -> theta-folded projection for this tile.
            acc = jnp.zeros((tm, o_pad), jnp.float32)
            for kk in range(order):                         # static unroll
                acc = acc + jnp.dot(slab_ref[kk, pl.ds(row, tm), :], w_ref[kk],
                                    preferred_element_type=jnp.float32)
            acc_ref[...] = (acc + b_ref[...]).astype(acc_ref.dtype)

    return kernel


# ----------------------------------------------------------------------------
# Path B2: out = l_norm @ acc, row-tiled, megacore-parallel.
# ----------------------------------------------------------------------------
def _aggregate_kernel(l_ref, acc_ref, out_ref):
    out_ref[...] = jnp.dot(l_ref[...], acc_ref[...],
                           preferred_element_type=jnp.float32
                           ).astype(out_ref.dtype)


# ----------------------------------------------------------------------------
# Wrapper.
# ----------------------------------------------------------------------------
@functools.partial(
    jax.jit,
    static_argnames=("order", "mxu_dtype", "force_tiled", "row_tile_cap"))
def gcn_aisummer_forward(x, edge_index, weight, bias, thetas, *, order,
                         mxu_dtype="bfloat16", force_tiled=False,
                         row_tile_cap=None):
    """x: [N, F] float32, edge_index (dense adjacency): [N, N]."""
    n, f = x.shape
    o = weight.shape[0]
    mdt = jnp.bfloat16 if str(mxu_dtype) == "bfloat16" else jnp.float32
    mdt_b = 2 if mdt == jnp.bfloat16 else 4
    row_align = 8 if mdt_b == 4 else 16           # sublane packing of mdt

    n_pad = _round_up(n, row_align)
    f_pad = _round_up(f, 128)                     # lane-dense feature blocks
    o_pad = _round_up(o, 128)                     # lane-dense output stores

    x = x.astype(jnp.float32)
    l_norm, deg = create_graph_lapl_norm(edge_index.astype(jnp.float32))

    # 2 / eigmax via power iteration (PyTorch skips eig entirely for order==1).
    if order > 1:
        eigmax = _largest_eigval(l_norm, deg)
        inv2 = (2.0 / eigmax).reshape(1).astype(jnp.float32)
    else:
        inv2 = jnp.ones((1,), jnp.float32)        # unused

    # Zero padding: zero rows/columns stay exactly zero through the Chebyshev
    # recursion, and padded acc rows (== bias) are multiplied by zero L
    # columns in the aggregation, so padding is semantics-free.
    l_pad = l_norm if n_pad == n else jnp.pad(
        l_norm, ((0, n_pad - n), (0, n_pad - n)))
    l_mxu = l_pad.astype(mdt)
    x_pad = jnp.pad(x, ((0, n_pad - n), (0, f_pad - f)))

    # Reorder the Linear weight into per-order blocks W_k[f, o] (PyTorch
    # interleaves the Chebyshev features as f*order + k), fold thetas for
    # order > 1, and zero-pad to lane-aligned [order, Fp, Op].
    if order > 1:
        w3 = jnp.transpose(weight.astype(jnp.float32).reshape(o, f, order),
                           (2, 1, 0))                               # [K, F, O]
        w3 = w3 * thetas.astype(jnp.float32)[:, None, None]
    else:
        w3 = weight.astype(jnp.float32).T[None]                     # [1, F, O]
    w3 = jnp.pad(w3, ((0, 0), (0, f_pad - f), (0, o_pad - o))).astype(mdt)
    b_pad = jnp.pad(bias.astype(jnp.float32).reshape(1, o),
                    ((0, 0), (0, o_pad - o)))

    capacity = _vmem_capacity_bytes()
    budget = int(capacity * 0.85)      # never ask for 100% of physical VMEM
    big_vmem = capacity >= (96 << 20)  # v5e/v6e (128 MiB) vs v7x (64 MiB)

    smem_spec = pl.BlockSpec(memory_space=pltpu.MemorySpace.SMEM)
    vmem_spec = pl.BlockSpec(memory_space=pltpu.MemorySpace.VMEM)

    # ---------------- Path A: fully fused single kernel ------------------
    est_a = (n_pad * n_pad * mdt_b                  # L
             + n_pad * f_pad * 4                    # x
             + order * f_pad * o_pad * mdt_b        # weights
             + o_pad * 4                            # bias
             + n_pad * o_pad * 4                    # out
             + n_pad * (3 * f_pad + o_pad) * 4)     # f32 recursion temps + acc
    use_fused = (not force_tiled) and (int(est_a * 1.15) <= budget)

    if use_fused:
        flops = (2 * n_pad * n_pad * f_pad * max(order - 1, 0)
                 + 2 * n_pad * f_pad * o_pad * order
                 + 2 * n_pad * n_pad * o_pad)
        hbm_bytes = (n_pad * n_pad * mdt_b + n_pad * f_pad * 4
                     + order * f_pad * o_pad * mdt_b + o_pad * 4
                     + n_pad * o_pad * 4)
        out = pl.pallas_call(
            _make_fused_kernel(order),
            out_shape=jax.ShapeDtypeStruct((n_pad, o_pad), jnp.float32),
            in_specs=[smem_spec, vmem_spec, vmem_spec, vmem_spec, vmem_spec],
            out_specs=vmem_spec,
            compiler_params=pltpu.CompilerParams(vmem_limit_bytes=budget),
            cost_estimate=pl.CostEstimate(flops=int(flops), transcendentals=0,
                                          bytes_accessed=int(hbm_bytes)),
        )(inv2, l_mxu, x_pad, w3, b_pad)
        return out[:n, :o]

    # ---------------- Path B: row-tiled kernels --------------------------
    cap1 = 512 if big_vmem else 256
    cap2 = 1024 if big_vmem else 256
    if row_tile_cap is not None:
        cap1 = min(cap1, int(row_tile_cap))
        cap2 = min(cap2, int(row_tile_cap))

    # B1: Chebyshev recursion + projection, grid (order, row tiles).
    fixed1 = (order * n_pad * f_pad * mdt_b            # resident T slab
              + order * f_pad * o_pad * mdt_b + o_pad * 4)
    per_row1 = 2 * (n_pad * mdt_b + f_pad * 4 + o_pad * mdt_b)
    tm1 = _pick_tile_fitting(n_pad, cap1, row_align, per_row1, fixed1, budget)
    nt1 = n_pad // tm1

    flops1 = (2 * n_pad * n_pad * f_pad * max(order - 1, 0)
              + 2 * n_pad * f_pad * o_pad * order)
    bytes1 = (order * n_pad * n_pad * mdt_b + order * n_pad * f_pad * 4
              + order * f_pad * o_pad * mdt_b + o_pad * 4
              + order * n_pad * o_pad * mdt_b)

    inv2_spec = pl.BlockSpec((1,), lambda k, i: (0,),
                             memory_space=pltpu.MemorySpace.SMEM)
    acc = pl.pallas_call(
        _make_cheb_proj_kernel(order, tm1, o_pad),
        out_shape=jax.ShapeDtypeStruct((n_pad, o_pad), mdt),
        grid=(order, nt1),
        in_specs=[
            inv2_spec,
            pl.BlockSpec((tm1, n_pad), lambda k, i: (i, 0)),     # L row tile
            pl.BlockSpec((tm1, f_pad), lambda k, i: (i, 0)),     # x row tile
            pl.BlockSpec((order, f_pad, o_pad), lambda k, i: (0, 0, 0)),
            pl.BlockSpec((1, o_pad), lambda k, i: (0, 0)),
        ],
        out_specs=pl.BlockSpec((tm1, o_pad), lambda k, i: (i, 0)),
        scratch_shapes=[pltpu.VMEM((order, n_pad, f_pad), mdt)],
        compiler_params=pltpu.CompilerParams(
            # Row tiles share the resident T slab across k steps -> serial.
            dimension_semantics=("arbitrary", "arbitrary"),
            vmem_limit_bytes=budget),
        cost_estimate=pl.CostEstimate(flops=int(flops1), transcendentals=0,
                                      bytes_accessed=int(bytes1)),
    )(inv2, l_mxu, x_pad, w3, b_pad)

    # B2: out = l_norm @ acc  (row-tiled, megacore-parallel).
    fixed2 = 2 * n_pad * o_pad * mdt_b                  # resident acc
    per_row2 = 2 * (n_pad * mdt_b + o_pad * 4)
    tm2 = _pick_tile_fitting(n_pad, cap2, row_align, per_row2, fixed2, budget)
    nt2 = n_pad // tm2

    out = pl.pallas_call(
        _aggregate_kernel,
        out_shape=jax.ShapeDtypeStruct((n_pad, o_pad), jnp.float32),
        grid=(nt2,),
        in_specs=[
            pl.BlockSpec((tm2, n_pad), lambda i: (i, 0)),        # L row tile
            pl.BlockSpec((n_pad, o_pad), lambda i: (0, 0)),      # acc resident
        ],
        out_specs=pl.BlockSpec((tm2, o_pad), lambda i: (i, 0)),
        compiler_params=pltpu.CompilerParams(
            dimension_semantics=("parallel",),
            vmem_limit_bytes=budget),
        cost_estimate=pl.CostEstimate(
            flops=int(2 * n_pad * n_pad * o_pad), transcendentals=0,
            bytes_accessed=int(n_pad * n_pad * mdt_b
                               + n_pad * o_pad * mdt_b + n_pad * o_pad * 4)),
    )(l_mxu, acc)
    return out[:n, :o]


# ----------------------------------------------------------------------------
# Pure-JAX reference (mirrors the PyTorch code literally) for verification.
# ----------------------------------------------------------------------------
def reference_forward(x, edge_index, weight, bias, thetas, order):
    a = edge_index.astype(jnp.float32)
    n = a.shape[-1]
    a = a + jnp.eye(n, dtype=jnp.float32)
    d_inv_sqrt = jnp.power(a.sum(-1), -0.5)
    l = (jnp.diag(d_inv_sqrt) @ a) @ jnp.diag(d_inv_sqrt)
    if order > 1:
        eigmax = jnp.max(jnp.linalg.eigvalsh(l))
        l_res = 2.0 * l / eigmax - jnp.eye(n, dtype=jnp.float32)
        t0 = x.astype(jnp.float32)
        powers = [t0 * thetas[0]]
        t1 = l_res @ t0
        powers.append(t1 * thetas[1])
        for k in range(2, order):
            t2 = 2.0 * (l_res @ t1) - t0
            powers.append(t2 * thetas[k])
            t0, t1 = t1, t2
        y = jnp.stack(powers, axis=-1).reshape(n, -1)   # interleaved layout
    else:
        y = x.astype(jnp.float32)
    y = y @ weight.T + bias
    return l @ y


if __name__ == "__main__":
    def run_case(n_nodes, f_in, f_out, order_, key, mxu, force_tiled,
                 row_tile_cap, rtol, atol):
        k_x, k_a, k_w, k_b = jax.random.split(key, 4)
        x = jax.random.normal(k_x, (n_nodes, f_in), dtype=jnp.float32)
        # Symmetric binary adjacency, zero diagonal (self-loops added inside).
        a_rand = jax.random.uniform(k_a, (n_nodes, n_nodes))
        adj = (a_rand > 0.7).astype(jnp.float32)
        adj = jnp.clip(adj + adj.T, 0.0, 1.0)
        adj = adj * (1.0 - jnp.eye(n_nodes, dtype=jnp.float32))
        # nn.Linear-style deterministic init.
        fan_in = f_in * order_
        bound = 1.0 / np.sqrt(fan_in)
        weight = jax.random.uniform(k_w, (f_out, fan_in), minval=-bound,
                                    maxval=bound, dtype=jnp.float32)
        bias = jax.random.uniform(k_b, (f_out,), minval=-bound, maxval=bound,
                                  dtype=jnp.float32)
        th = np.square(np.arange(order_, 0, -1)).astype(np.float64)
        thetas = jnp.asarray(th / th.sum(), dtype=jnp.float32)

        ref = reference_forward(x, adj, weight, bias, thetas, order_)
        out = jax.block_until_ready(gcn_aisummer_forward(
            x, adj, weight, bias, thetas, order=order_, mxu_dtype=mxu,
            force_tiled=force_tiled, row_tile_cap=row_tile_cap))
        np.testing.assert_allclose(np.asarray(out), np.asarray(ref),
                                   rtol=rtol, atol=atol)

    key = jax.random.PRNGKey(0)
    k1, k2, k3, k4 = jax.random.split(key, 4)

    # Path A (fully fused, resident) -- f32 tight, bf16 loose.
    run_case(16, 8, 32, 3, k1, "float32", False, None, 1e-4, 1e-4)
    run_case(16, 8, 32, 3, k2, "bfloat16", False, None, 5e-2, 5e-2)

    # Path B (row-tiled fallback, forced, small row tiles -> multi-tile grid).
    run_case(256, 8, 32, 3, k3, "float32", True, 64, 2e-3, 2e-3)
    run_case(256, 8, 32, 3, k4, "bfloat16", True, 64, 5e-2, 5e-2)

    print("KERNEL_OK")
</pallas_src>

<mosaic_0001>
module attributes {stable_mosaic.version = 11 : i64} {
  func.func @kernel(%arg0: memref<1xf32, #tpu.memory_space<smem>>, %arg1: memref<16x16xf32, #tpu.memory_space<vmem>>, %arg2: memref<16x128xf32, #tpu.memory_space<vmem>>, %arg3: memref<3x128x128xf32, #tpu.memory_space<vmem>>, %arg4: memref<1x128xf32, #tpu.memory_space<vmem>>, %arg5: memref<16x128xf32, #tpu.memory_space<vmem>>) attributes {dimension_semantics = [], scalar_prefetch = 0 : i64, scratch_operands = 0 : i64, tpu.core_type = #tpu.core_type<tc>} {
    %c0 = arith.constant 0 : index
    %c0_0 = arith.constant 0 : index
    %0 = vector.load %arg1[%c0, %c0_0] : memref<16x16xf32, #tpu.memory_space<vmem>>, vector<16x16xf32>
    %c0_1 = arith.constant 0 : index
    %c0_2 = arith.constant 0 : index
    %1 = vector.load %arg2[%c0_1, %c0_2] : memref<16x128xf32, #tpu.memory_space<vmem>>, vector<16x128xf32>
    %c0_3 = arith.constant 0 : index
    %c0_4 = arith.constant 0 : index
    %c0_5 = arith.constant 0 : index
    %2 = vector.load %arg3[%c0_3, %c0_4, %c0_5] : memref<3x128x128xf32, #tpu.memory_space<vmem>>, vector<1x128x128xf32>
    %3 = vector.shape_cast %2 : vector<1x128x128xf32> to vector<128x128xf32>
    %cst = arith.constant dense<0.000000e+00> : vector<16x128xf32>
    %4 = tpu.matmul %1, %3, %cst {dimension_numbers = #tpu.dot_dimension_numbers<[1], [0], [0], [1], [0, 0, 1, 1], [], []>} : vector<16x128xf32>, vector<128x128xf32>, vector<16x128xf32> -> vector<16x128xf32>
    %c0_6 = arith.constant 0 : index
    %5 = memref.load %arg0[%c0_6] : memref<1xf32, #tpu.memory_space<smem>>
    %cst_7 = arith.constant dense<0.000000e+00> : vector<16x128xf32>
    %6 = tpu.matmul %0, %1, %cst_7 {dimension_numbers = #tpu.dot_dimension_numbers<[1], [0], [0], [1], [0, 0, 1, 1], [], []>} : vector<16x16xf32>, vector<16x128xf32>, vector<16x128xf32> -> vector<16x128xf32>
    %7 = vector.broadcast %5 : f32 to vector<16x128xf32>
    %8 = arith.mulf %7, %6 : vector<16x128xf32>
    %9 = arith.subf %8, %1 : vector<16x128xf32>
    %c1 = arith.constant 1 : index
    %c0_8 = arith.constant 0 : index
    %c0_9 = arith.constant 0 : index
    %10 = vector.load %arg3[%c1, %c0_8, %c0_9] : memref<3x128x128xf32, #tpu.memory_space<vmem>>, vector<1x128x128xf32>
    %11 = vector.shape_cast %10 : vector<1x128x128xf32> to vector<128x128xf32>
    %cst_10 = arith.constant dense<0.000000e+00> : vector<16x128xf32>
    %12 = tpu.matmul %9, %11, %cst_10 {dimension_numbers = #tpu.dot_dimension_numbers<[1], [0], [0], [1], [0, 0, 1, 1], [], []>} : vector<16x128xf32>, vector<128x128xf32>, vector<16x128xf32> -> vector<16x128xf32>
    %13 = arith.addf %4, %12 : vector<16x128xf32>
    %cst_11 = arith.constant dense<0.000000e+00> : vector<16x128xf32>
    %14 = tpu.matmul %0, %9, %cst_11 {dimension_numbers = #tpu.dot_dimension_numbers<[1], [0], [0], [1], [0, 0, 1, 1], [], []>} : vector<16x16xf32>, vector<16x128xf32>, vector<16x128xf32> -> vector<16x128xf32>
    %15 = vector.broadcast %5 : f32 to vector<16x128xf32>
    %16 = arith.mulf %15, %14 : vector<16x128xf32>
    %17 = arith.subf %16, %9 : vector<16x128xf32>
    %cst_12 = arith.constant 2.000000e+00 : f32
    %18 = vector.broadcast %cst_12 : f32 to vector<16x128xf32>
    %19 = arith.mulf %18, %17 : vector<16x128xf32>
    %20 = arith.subf %19, %1 : vector<16x128xf32>
    %c2 = arith.constant 2 : index
    %c0_13 = arith.constant 0 : index
    %c0_14 = arith.constant 0 : index
    %21 = vector.load %arg3[%c2, %c0_13, %c0_14] : memref<3x128x128xf32, #tpu.memory_space<vmem>>, vector<1x128x128xf32>
    %22 = vector.shape_cast %21 : vector<1x128x128xf32> to vector<128x128xf32>
    %cst_15 = arith.constant dense<0.000000e+00> : vector<16x128xf32>
    %23 = tpu.matmul %20, %22, %cst_15 {dimension_numbers = #tpu.dot_dimension_numbers<[1], [0], [0], [1], [0, 0, 1, 1], [], []>} : vector<16x128xf32>, vector<128x128xf32>, vector<16x128xf32> -> vector<16x128xf32>
    %24 = arith.addf %13, %23 : vector<16x128xf32>
    %c0_16 = arith.constant 0 : index
    %c0_17 = arith.constant 0 : index
    %25 = vector.load %arg4[%c0_16, %c0_17] : memref<1x128xf32, #tpu.memory_space<vmem>>, vector<1x128xf32>
    %26 = vector.broadcast %25 : vector<1x128xf32> to vector<16x128xf32>
    %27 = arith.addf %24, %26 : vector<16x128xf32>
    %cst_18 = arith.constant dense<0.000000e+00> : vector<16x128xf32>
    %28 = tpu.matmul %0, %27, %cst_18 {dimension_numbers = #tpu.dot_dimension_numbers<[1], [0], [0], [1], [0, 0, 1, 1], [], []>} : vector<16x16xf32>, vector<16x128xf32>, vector<16x128xf32> -> vector<16x128xf32>
    %c0_19 = arith.constant 0 : index
    %c0_20 = arith.constant 0 : index
    %29 = vector.load %arg5[%c0_19, %c0_20] : memref<16x128xf32, #tpu.memory_space<vmem>>, vector<16x128xf32>
    tpu.vector_store %arg5[%c0_19, %c0_20], %28 {strides = array<i32>} : memref<16x128xf32, #tpu.memory_space<vmem>>, vector<16x128xf32>,
    return
  }
}

</mosaic_0001>

<llo_original>
// kernel: gcn_aisummer_forward.1
$region0: #{gcn_aisummer_forward.1}
  #allocation0 [shape = 'u32[]', space=smem, size = 0x4, offset = 0x4, fixed_abs, tag = 'smem constant byte address 0x4 - core index']
  #allocation1 [shape = 'u32[144,128]{1,0:T(1,128)}', space=vmem, size = 0x12000, scoped, tag = 'internal scratch']
  #allocation2 [shape = 'f32[1]{0:T(128)S(6)}', space=smem, size = 0x200, scoped, tag = 'scoped memory for gcn_aisummer_forward.1']
  %s0 = inlined_call_operand.<no memory space> [shape: f32[1], index: 0, kind: input, shape index: {}]
  %s1 = inlined_call_operand.vmem [shape: f32[16,16], index: 1, kind: input, shape index: {}]
  %s2 = inlined_call_operand.vmem [shape: f32[16,128], index: 2, kind: input, shape index: {}]
  %s3 = inlined_call_operand.vmem [shape: f32[3,128,128], index: 3, kind: input, shape index: {}]
  %s4 = inlined_call_operand.vmem [shape: f32[1,128], index: 4, kind: input, shape index: {}]
  %s5 = inlined_call_operand.hbm [shape: f32[16,128], index: 5, kind: output, shape index: {}]
  %s6 = sld [smem:[#allocation0]]
  $region30: #{gcn_aisummer_forward.1} parent=0
    _
  %s8 = ssub.s32 1, %s6
  %s9 = scalar_select 0, %s8, %s6
  %10 = sst [smem:[#allocation2]] %s0
  $region1: #{gcn_aisummer_forward.1} parent=0
    #allocation3 [shape = 'u8[8192]{0}', space=vmem, size = 0x2000, scoped, tag = 'output window, operand 0, single buffered']
    #allocation4 [shape = 's32[1]{0}', space=sflag, size = 0x4, scoped, tag = 'scoped memory for gcn_aisummer_forward.1']
    %11 = vsyncpa [#allocation4], 0
    // Predicated region
    $region2: #{gcn_aisummer_forward.1} parent=1 // pred_check
      _
    $region3: #{gcn_aisummer_forward.1} parent=1 // pred_check_branch
      %13 = sbr.rel (0) target = $region5
    $region4: #{gcn_aisummer_forward.1} parent=1 // pred_region
      _
    $region5: #{gcn_aisummer_forward.1} parent=1 // pred_fallthru
      _
    // Predicated region
    $region6: #{gcn_aisummer_forward.1} parent=1 // pred_check
      _
    $region7: #{gcn_aisummer_forward.1} parent=1 // pred_check_branch
      %15 = sbr.rel (0) target = $region9
    $region8: #{gcn_aisummer_forward.1} parent=1 // pred_region
      _
    $region9: #{gcn_aisummer_forward.1} parent=1 // pred_fallthru
      _
    // Predicated region
    $region10: #{gcn_aisummer_forward.1} parent=1 // pred_check
      _
    $region11: #{gcn_aisummer_forward.1} parent=1 // pred_check_branch
      %17 = sbr.rel (0) target = $region13
    $region12: #{gcn_aisummer_forward.1} parent=1 // pred_region
      _
    $region13: #{gcn_aisummer_forward.1} parent=1 // pred_fallthru
      _
    // Predicated region
    $region14: #{gcn_aisummer_forward.1} parent=1 // pred_check
      _
    $region15: #{gcn_aisummer_forward.1} parent=1 // pred_check_branch
      %19 = sbr.rel (0) target = $region17
    $region16: #{gcn_aisummer_forward.1} parent=1 // pred_region
      _
    $region17: #{gcn_aisummer_forward.1} parent=1 // pred_fallthru
      _
    // Predicated region
    $region18: #{gcn_aisummer_forward.1} parent=1 // pred_check
      _
    $region19: #{gcn_aisummer_forward.1} parent=1 // pred_check_branch
      %21 = sbr.rel (0) target = $region21
    $region20: #{gcn_aisummer_forward.1} parent=1 // pred_region
      _
    $region21: #{gcn_aisummer_forward.1} parent=1 // pred_fallthru
      _
    %v22 = vld [vmem:[%s1] sm:$0xff]
    %v23 = vld [vmem:[%s1 + $0x8] sm:$0xff]
    %v24 = vld [vmem:[%s2] sm:$0xff]
    %v25 = vld [vmem:[%s2 + $0x8] sm:$0xff]
    %v26 = vld [vmem:[%s3] sm:$0xff]
    %v27 = vld [vmem:[%s3 + $0x8] sm:$0xff]
    %v28 = vld [vmem:[%s3 + $0x10] sm:$0xff]
    %v29 = vld [vmem:[%s3 + $0x18] sm:$0xff]
    %v30 = vld [vmem:[%s3 + $0x20] sm:$0xff]
    %v31 = vld [vmem:[%s3 + $0x28] sm:$0xff]
    %v32 = vld [vmem:[%s3 + $0x30] sm:$0xff]
    %v33 = vld [vmem:[%s3 + $0x38] sm:$0xff]
    %v34 = vld [vmem:[%s3 + $0x40] sm:$0xff]
    %v35 = vld [vmem:[%s3 + $0x48] sm:$0xff]
    %v36 = vld [vmem:[%s3 + $0x50] sm:$0xff]
    %v37 = vld [vmem:[%s3 + $0x58] sm:$0xff]
    %v38 = vld [vmem:[%s3 + $0x60] sm:$0xff]
    %v39 = vld [vmem:[%s3 + $0x68] sm:$0xff]
    %v40 = vld [vmem:[%s3 + $0x70] sm:$0xff]
    %v41 = vld [vmem:[%s3 + $0x78] sm:$0xff]
    %s42 = sld [smem:[#allocation2]]
    %vm43 = vcmask 130048
    %v45 = vsel %vm43, %v22, 0
    %v48 = vsel %vm43, %v23, 0
    %50 = vmatprep.subr.mxu0 0.0
    %51 = vmatpush1.msra.mxu0 %v24
    %52 = vmatprep.subr.mxu0 0.0
    %53 = vmatpush1.msra.mxu0 %v25
    %54 = vmatprep.subr.mxu0 0.0
    %55 = vmatpush1.msra.mxu0 0.0
    %56 = vmatprep.subr.mxu0 0.0
    %57 = vmatpush1.msra.mxu0 0.0
    %58 = vmatprep.subr.mxu0 0.0
    %59 = vmatpush1.msra.mxu0 0.0
    %60 = vmatprep.subr.mxu0 0.0
    %61 = vmatpush1.msra.mxu0 0.0
    %62 = vmatprep.subr.mxu0 0.0
    %63 = vmatpush1.msra.mxu0 0.0
    %64 = vmatprep.subr.mxu0 0.0
    %65 = vmatpush1.msra.mxu0 0.0
    %66 = vmatprep.subr.mxu0 0.0
    %67 = vmatpush1.msra.mxu0 0.0
    %68 = vmatprep.subr.mxu0 0.0
    %69 = vmatpush1.msra.mxu0 0.0
    %70 = vmatprep.subr.mxu0 0.0
    %71 = vmatpush1.msra.mxu0 0.0
    %72 = vmatprep.subr.mxu0 0.0
    %73 = vmatpush1.msra.mxu0 0.0
    %74 = vmatprep.subr.mxu0 0.0
    %75 = vmatpush1.msra.mxu0 0.0
    %76 = vmatprep.subr.mxu0 0.0
    %77 = vmatpush1.msra.mxu0 0.0
    %78 = vmatprep.subr.mxu0 0.0
    %79 = vmatpush1.msra.mxu0 0.0
    %80 = vmatprep.subr.mxu0 0.0
    %81 = vmatpush1.msra.mxu0 0.0
    %82 = vmatprep.subr.mxu0 0.0
    %83 = vmatpush1.msra.mxu0 0.0
    %84 = vmatprep.subr.mxu0 0.0
    %85 = vmatpush1.msra.mxu0 0.0
    %86 = vmatprep.subr.mxu0 0.0
    %87 = vmatpush1.msra.mxu0 0.0
    %88 = vmatprep.subr.mxu0 0.0
    %89 = vmatpush1.msra.mxu0 0.0
    %90 = vmatprep.subr.mxu0 0.0
    %91 = vmatpush1.msra.mxu0 0.0
    %92 = vmatprep.subr.mxu0 0.0
    %93 = vmatpush1.msra.mxu0 0.0
    %94 = vmatprep.subr.mxu0 0.0
    %95 = vmatpush1.msra.mxu0 0.0
    %96 = vmatprep.subr.mxu0 0.0
    %97 = vmatpush1.msra.mxu0 0.0
    %98 = vmatprep.subr.mxu0 0.0
    %99 = vmatpush1.msra.mxu0 0.0
    %100 = vmatprep.subr.mxu0 0.0
    %101 = vmatpush1.msra.mxu0 0.0
    %102 = vmatprep.subr.mxu0 0.0
    %103 = vmatpush1.msra.mxu0 0.0
    %104 = vmatprep.subr.mxu0 0.0
    %105 = vmatpush1.msra.mxu0 0.0
    %106 = vmatprep.subr.mxu0 0.0
    %107 = vmatpush1.msra.mxu0 0.0
    %108 = vmatprep.subr.mxu0 0.0
    %109 = vmatpush1.msra.mxu0 0.0
    %110 = vmatprep.subr.mxu0 0.0
    %111 = vmatpush1.msra.mxu0 0.0
    %112 = vmatprep.subr.mxu0 0.0
    %113 = vmatpush1.msra.mxu0 0.0
    %114 = vmatprep.mubr.f32.mxu0 0.0
    %115 = vmatmul.mubr.f32.gmra.mrb[0].mxu0 %v45
    %v116 = vpop.f32.mrb[0].mxu0
    %v117 = vadd.f32 0.0, %v116
    %v118 = vpop.f32.mrb[0].mxu0
    %119 = vmatprep.mubr.f32.mxu0 0.0
    %120 = vmatmul.mubr.f32.gmra.mrb[0].mxu0 %v48
    %v121 = vpop.f32.mrb[0].mxu0
    %v122 = vadd.f32 0.0, %v121
    %v123 = vpop.f32.mrb[0].mxu0
    %124 = vdwg.mxu0
    %v125 = vstv %s42
    %v126 = vmul.f32 %v125, %v117
    %v127 = vmul.f32 %v125, %v122
    %v128 = vsub.f32 %v126, %v24
    %v129 = vsub.f32 %v127, %v25
    %s130 = scalar_lea.vmem %s3, 128
    %v131 = vld [vmem:[%s130] sm:$0xff]
    %v132 = vld [vmem:[%s130 + $0x8] sm:$0xff]
    %v133 = vld [vmem:[%s130 + $0x10] sm:$0xff]
    %v134 = vld [vmem:[%s130 + $0x18] sm:$0xff]
    %v135 = vld [vmem:[%s130 + $0x20] sm:$0xff]
    %v136 = vld [vmem:[%s130 + $0x28] sm:$0xff]
    %v137 = vld [vmem:[%s130 + $0x30] sm:$0xff]
    %v138 = vld [vmem:[%s130 + $0x38] sm:$0xff]
    %v139 = vld [vmem:[%s130 + $0x40] sm:$0xff]
    %v140 = vld [vmem:[%s130 + $0x48] sm:$0xff]
    %v141 = vld [vmem:[%s130 + $0x50] sm:$0xff]
    %v142 = vld [vmem:[%s130 + $0x58] sm:$0xff]
    %v143 = vld [vmem:[%s130 + $0x60] sm:$0xff]
    %v144 = vld [vmem:[%s130 + $0x68] sm:$0xff]
    %v145 = vld [vmem:[%s130 + $0x70] sm:$0xff]
    %v146 = vld [vmem:[%s130 + $0x78] sm:$0xff]
    %147 = vmatprep.subr.mxu0 0.0
    %148 = vmatpush1.msra.mxu0 %v131
    %149 = vmatprep.subr.mxu0 0.0
    %150 = vmatpush1.msra.mxu0 %v132
    %151 = vmatprep.subr.mxu0 0.0
    %152 = vmatpush1.msra.mxu0 %v133
    %153 = vmatprep.subr.mxu0 0.0
    %154 = vmatpush1.msra.mxu0 %v134
    %155 = vmatprep.subr.mxu0 0.0
    %156 = vmatpush1.msra.mxu0 %v135
    %157 = vmatprep.subr.mxu0 0.0
    %158 = vmatpush1.msra.mxu0 %v136
    %159 = vmatprep.subr.mxu0 0.0
    %160 = vmatpush1.msra.mxu0 %v137
    %161 = vmatprep.subr.mxu0 0.0
    %162 = vmatpush1.msra.mxu0 %v138
    %163 = vmatprep.subr.mxu0 0.0
    %164 = vmatpush1.msra.mxu0 %v139
    %165 = vmatprep.subr.mxu0 0.0
    %166 = vmatpush1.msra.mxu0 %v140
    %167 = vmatprep.subr.mxu0 0.0
    %168 = vmatpush1.msra.mxu0 %v141
    %169 = vmatprep.subr.mxu0 0.0
    %170 = vmatpush1.msra.mxu0 %v142
    %171 = vmatprep.subr.mxu0 0.0
    %172 = vmatpush1.msra.mxu0 %v143
    %173 = vmatprep.subr.mxu0 0.0
    %174 = vmatpush1.msra.mxu0 %v144
    %175 = vmatprep.subr.mxu0 0.0
    %176 = vmatpush1.msra.mxu0 %v145
    %177 = vmatprep.subr.mxu0 0.0
    %178 = vmatpush1.msra.mxu0 %v146
    %179 = vmatprep.subr.mxu0 0.0
    %180 = vmatpush1.msra.mxu0 0.0
    %181 = vmatprep.subr.mxu0 0.0
    %182 = vmatpush1.msra.mxu0 0.0
    %183 = vmatprep.subr.mxu0 0.0
    %184 = vmatpush1.msra.mxu0 0.0
    %185 = vmatprep.subr.mxu0 0.0
    %186 = vmatpush1.msra.mxu0 0.0
    %187 = vmatprep.subr.mxu0 0.0
    %188 = vmatpush1.msra.mxu0 0.0
    %189 = vmatprep.subr.mxu0 0.0
    %190 = vmatpush1.msra.mxu0 0.0
    %191 = vmatprep.subr.mxu0 0.0
    %192 = vmatpush1.msra.mxu0 0.0
    %193 = vmatprep.subr.mxu0 0.0
    %194 = vmatpush1.msra.mxu0 0.0
    %195 = vmatprep.subr.mxu0 0.0
    %196 = vmatpush1.msra.mxu0 0.0
    %197 = vmatprep.subr.mxu0 0.0
    %198 = vmatpush1.msra.mxu0 0.0
    %199 = vmatprep.subr.mxu0 0.0
    %200 = vmatpush1.msra.mxu0 0.0
    %201 = vmatprep.subr.mxu0 0.0
    %202 = vmatpush1.msra.mxu0 0.0
    %203 = vmatprep.subr.mxu0 0.0
    %204 = vmatpush1.msra.mxu0 0.0
    %205 = vmatprep.subr.mxu0 0.0
    %206 = vmatpush1.msra.mxu0 0.0
    %207 = vmatprep.subr.mxu0 0.0
    %208 = vmatpush1.msra.mxu0 0.0
    %209 = vmatprep.subr.mxu0 0.0
    %210 = vmatpush1.msra.mxu0 0.0
    %211 = vmatprep.mubr.f32.mxu0 0.0
    %212 = vmatmul.mubr.f32.gmra.mrb[0].mxu0 %v128
    %v213 = vpop.f32.mrb[0].mxu0
    %v214 = vadd.f32 0.0, %v213
    %v215 = vpop.f32.mrb[0].mxu0
    %216 = vmatprep.mubr.f32.mxu0 0.0
    %217 = vmatmul.mubr.f32.gmra.mrb[0].mxu0 %v129
    %v218 = vpop.f32.mrb[0].mxu0
    %v219 = vadd.f32 0.0, %v218
    %v220 = vpop.f32.mrb[0].mxu0
    %221 = vdwg.mxu0
    %222 = vmatprep.subr.mxu0 0.0
    %223 = vmatpush1.msra.mxu0 %v26
    %224 = vmatprep.subr.mxu0 0.0
    %225 = vmatpush1.msra.mxu0 %v27
    %226 = vmatprep.subr.mxu0 0.0
    %227 = vmatpush1.msra.mxu0 %v28
    %228 = vmatprep.subr.mxu0 0.0
    %229 = vmatpush1.msra.mxu0 %v29
    %230 = vmatprep.subr.mxu0 0.0
    %231 = vmatpush1.msra.mxu0 %v30
    %232 = vmatprep.subr.mxu0 0.0
    %233 = vmatpush1.msra.mxu0 %v31
    %234 = vmatprep.subr.mxu0 0.0
    %235 = vmatpush1.msra.mxu0 %v32
    %236 = vmatprep.subr.mxu0 0.0
    %237 = vmatpush1.msra.mxu0 %v33
    %238 = vmatprep.subr.mxu0 0.0
    %239 = vmatpush1.msra.mxu0 %v34
    %240 = vmatprep.subr.mxu0 0.0
    %241 = vmatpush1.msra.mxu0 %v35
    %242 = vmatprep.subr.mxu0 0.0
    %243 = vmatpush1.msra.mxu0 %v36
    %244 = vmatprep.subr.mxu0 0.0
    %245 = vmatpush1.msra.mxu0 %v37
    %246 = vmatprep.subr.mxu0 0.0
    %247 = vmatpush1.msra.mxu0 %v38
    %248 = vmatprep.subr.mxu0 0.0
    %249 = vmatpush1.msra.mxu0 %v39
    %250 = vmatprep.subr.mxu0 0.0
    %251 = vmatpush1.msra.mxu0 %v40
    %252 = vmatprep.subr.mxu0 0.0
    %253 = vmatpush1.msra.mxu0 %v41
    %254 = vmatprep.subr.mxu0 0.0
    %255 = vmatpush1.msra.mxu0 0.0
    %256 = vmatprep.subr.mxu0 0.0
    %257 = vmatpush1.msra.mxu0 0.0
    %258 = vmatprep.subr.mxu0 0.0
    %259 = vmatpush1.msra.mxu0 0.0
    %260 = vmatprep.subr.mxu0 0.0
    %261 = vmatpush1.msra.mxu0 0.0
    %262 = vmatprep.subr.mxu0 0.0
    %263 = vmatpush1.msra.mxu0 0.0
    %264 = vmatprep.subr.mxu0 0.0
    %265 = vmatpush1.msra.mxu0 0.0
    %266 = vmatprep.subr.mxu0 0.0
    %267 = vmatpush1.msra.mxu0 0.0
    %268 = vmatprep.subr.mxu0 0.0
    %269 = vmatpush1.msra.mxu0 0.0
    %270 = vmatprep.subr.mxu0 0.0
    %271 = vmatpush1.msra.mxu0 0.0
    %272 = vmatprep.subr.mxu0 0.0
    %273 = vmatpush1.msra.mxu0 0.0
    %274 = vmatprep.subr.mxu0 0.0
    %275 = vmatpush1.msra.mxu0 0.0
    %276 = vmatprep.subr.mxu0 0.0
    %277 = vmatpush1.msra.mxu0 0.0
    %278 = vmatprep.subr.mxu0 0.0
    %279 = vmatpush1.msra.mxu0 0.0
    %280 = vmatprep.subr.mxu0 0.0
    %281 = vmatpush1.msra.mxu0 0.0
    %282 = vmatprep.subr.mxu0 0.0
    %283 = vmatpush1.msra.mxu0 0.0
    %284 = vmatprep.subr.mxu0 0.0
    %285 = vmatpush1.msra.mxu0 0.0
    %286 = vmatprep.mubr.f32.mxu0 0.0
    %287 = vmatmul.mubr.f32.gmra.mrb[0].mxu0 %v24
    %v288 = vpop.f32.mrb[0].mxu0
    %v289 = vadd.f32 %v214, %v288
    %v290 = vpop.f32.mrb[0].mxu0
    %291 = vmatprep.mubr.f32.mxu0 0.0
    %292 = vmatmul.mubr.f32.gmra.mrb[0].mxu0 %v25
    %v293 = vpop.f32.mrb[0].mxu0
    %v294 = vadd.f32 %v219, %v293
    %v295 = vpop.f32.mrb[0].mxu0
    %296 = vdwg.mxu0
    %297 = vmatprep.subr.mxu0 0.0
    %298 = vmatpush1.msra.mxu0 %v128
    %299 = vmatprep.subr.mxu0 0.0
    %300 = vmatpush1.msra.mxu0 %v129
    %301 = vmatprep.subr.mxu0 0.0
    %302 = vmatpush1.msra.mxu0 0.0
    %303 = vmatprep.subr.mxu0 0.0
    %304 = vmatpush1.msra.mxu0 0.0
    %305 = vmatprep.subr.mxu0 0.0
    %306 = vmatpush1.msra.mxu0 0.0
    %307 = vmatprep.subr.mxu0 0.0
    %308 = vmatpush1.msra.mxu0 0.0
    %309 = vmatprep.subr.mxu0 0.0
    %310 = vmatpush1.msra.mxu0 0.0
    %311 = vmatprep.subr.mxu0 0.0
    %312 = vmatpush1.msra.mxu0 0.0
    %313 = vmatprep.subr.mxu0 0.0
    %314 = vmatpush1.msra.mxu0 0.0
    %315 = vmatprep.subr.mxu0 0.0
    %316 = vmatpush1.msra.mxu0 0.0
    %317 = vmatprep.subr.mxu0 0.0
    %318 = vmatpush1.msra.mxu0 0.0
    %319 = vmatprep.subr.mxu0 0.0
    %320 = vmatpush1.msra.mxu0 0.0
    %321 = vmatprep.subr.mxu0 0.0
    %322 = vmatpush1.msra.mxu0 0.0
    %323 = vmatprep.subr.mxu0 0.0
    %324 = vmatpush1.msra.mxu0 0.0
    %325 = vmatprep.subr.mxu0 0.0
    %326 = vmatpush1.msra.mxu0 0.0
    %327 = vmatprep.subr.mxu0 0.0
    %328 = vmatpush1.msra.mxu0 0.0
    %329 = vmatprep.subr.mxu0 0.0
    %330 = vmatpush1.msra.mxu0 0.0
    %331 = vmatprep.subr.mxu0 0.0
    %332 = vmatpush1.msra.mxu0 0.0
    %333 = vmatprep.subr.mxu0 0.0
    %334 = vmatpush1.msra.mxu0 0.0
    %335 = vmatprep.subr.mxu0 0.0
    %336 = vmatpush1.msra.mxu0 0.0
    %337 = vmatprep.subr.mxu0 0.0
    %338 = vmatpush1.msra.mxu0 0.0
    %339 = vmatprep.subr.mxu0 0.0
    %340 = vmatpush1.msra.mxu0 0.0
    %341 = vmatprep.subr.mxu0 0.0
    %342 = vmatpush1.msra.mxu0 0.0
    %343 = vmatprep.subr.mxu0 0.0
    %344 = vmatpush1.msra.mxu0 0.0
    %345 = vmatprep.subr.mxu0 0.0
    %346 = vmatpush1.msra.mxu0 0.0
    %347 = vmatprep.subr.mxu0 0.0
    %348 = vmatpush1.msra.mxu0 0.0
    %349 = vmatprep.subr.mxu0 0.0
    %350 = vmatpush1.msra.mxu0 0.0
    %351 = vmatprep.subr.mxu0 0.0
    %352 = vmatpush1.msra.mxu0 0.0
    %353 = vmatprep.subr.mxu0 0.0
    %354 = vmatpush1.msra.mxu0 0.0
    %355 = vmatprep.subr.mxu0 0.0
    %356 = vmatpush1.msra.mxu0 0.0
    %357 = vmatprep.subr.mxu0 0.0
    %358 = vmatpush1.msra.mxu0 0.0
    %359 = vmatprep.subr.mxu0 0.0
    %360 = vmatpush1.msra.mxu0 0.0
    %361 = vmatprep.mubr.f32.mxu0 0.0
    %362 = vmatmul.mubr.f32.gmra.mrb[0].mxu0 %v45
    %v363 = vpop.f32.mrb[0].mxu0
    %v364 = vadd.f32 0.0, %v363
    %v365 = vpop.f32.mrb[0].mxu0
    %366 = vmatprep.mubr.f32.mxu0 0.0
    %367 = vmatmul.mubr.f32.gmra.mrb[0].mxu0 %v48
    %v368 = vpop.f32.mrb[0].mxu0
    %v369 = vadd.f32 0.0, %v368
    %v370 = vpop.f32.mrb[0].mxu0
    %371 = vdwg.mxu0
    %v372 = vmul.f32 %v125, %v364
    %v373 = vmul.f32 %v125, %v369
    %v374 = vsub.f32 %v372, %v128
    %v375 = vsub.f32 %v373, %v129
    %v376 = vmul.f32 %v374, 2.0
    %v377 = vmul.f32 %v375, 2.0
    %v378 = vsub.f32 %v376, %v24
    %v379 = vsub.f32 %v377, %v25
    %s380 = scalar_lea.vmem %s3, 256
    %v381 = vld [vmem:[%s380] sm:$0xff]
    %v382 = vld [vmem:[%s380 + $0x8] sm:$0xff]
    %v383 = vld [vmem:[%s380 + $0x10] sm:$0xff]
    %v384 = vld [vmem:[%s380 + $0x18] sm:$0xff]
    %v385 = vld [vmem:[%s380 + $0x20] sm:$0xff]
    %v386 = vld [vmem:[%s380 + $0x28] sm:$0xff]
    %v387 = vld [vmem:[%s380 + $0x30] sm:$0xff]
    %v388 = vld [vmem:[%s380 + $0x38] sm:$0xff]
    %v389 = vld [vmem:[%s380 + $0x40] sm:$0xff]
    %v390 = vld [vmem:[%s380 + $0x48] sm:$0xff]
    %v391 = vld [vmem:[%s380 + $0x50] sm:$0xff]
    %v392 = vld [vmem:[%s380 + $0x58] sm:$0xff]
    %v393 = vld [vmem:[%s380 + $0x60] sm:$0xff]
    %v394 = vld [vmem:[%s380 + $0x68] sm:$0xff]
    %v395 = vld [vmem:[%s380 + $0x70] sm:$0xff]
    %v396 = vld [vmem:[%s380 + $0x78] sm:$0xff]
    %397 = vmatprep.subr.mxu0 0.0
    %398 = vmatpush1.msra.mxu0 %v381
    %399 = vmatprep.subr.mxu0 0.0
    %400 = vmatpush1.msra.mxu0 %v382
    %401 = vmatprep.subr.mxu0 0.0
    %402 = vmatpush1.msra.mxu0 %v383
    %403 = vmatprep.subr.mxu0 0.0
    %404 = vmatpush1.msra.mxu0 %v384
    %405 = vmatprep.subr.mxu0 0.0
    %406 = vmatpush1.msra.mxu0 %v385
    %407 = vmatprep.subr.mxu0 0.0
    %408 = vmatpush1.msra.mxu0 %v386
    %409 = vmatprep.subr.mxu0 0.0
    %410 = vmatpush1.msra.mxu0 %v387
    %411 = vmatprep.subr.mxu0 0.0
    %412 = vmatpush1.msra.mxu0 %v388
    %413 = vmatprep.subr.mxu0 0.0
    %414 = vmatpush1.msra.mxu0 %v389
    %415 = vmatprep.subr.mxu0 0.0
    %416 = vmatpush1.msra.mxu0 %v390
    %417 = vmatprep.subr.mxu0 0.0
    %418 = vmatpush1.msra.mxu0 %v391
    %419 = vmatprep.subr.mxu0 0.0
    %420 = vmatpush1.msra.mxu0 %v392
    %421 = vmatprep.subr.mxu0 0.0
    %422 = vmatpush1.msra.mxu0 %v393
    %423 = vmatprep.subr.mxu0 0.0
    %424 = vmatpush1.msra.mxu0 %v394
    %425 = vmatprep.subr.mxu0 0.0
    %426 = vmatpush1.msra.mxu0 %v395
    %427 = vmatprep.subr.mxu0 0.0
    %428 = vmatpush1.msra.mxu0 %v396
    %429 = vmatprep.subr.mxu0 0.0
    %430 = vmatpush1.msra.mxu0 0.0
    %431 = vmatprep.subr.mxu0 0.0
    %432 = vmatpush1.msra.mxu0 0.0
    %433 = vmatprep.subr.mxu0 0.0
    %434 = vmatpush1.msra.mxu0 0.0
    %435 = vmatprep.subr.mxu0 0.0
    %436 = vmatpush1.msra.mxu0 0.0
    %437 = vmatprep.subr.mxu0 0.0
    %438 = vmatpush1.msra.mxu0 0.0
    %439 = vmatprep.subr.mxu0 0.0
    %440 = vmatpush1.msra.mxu0 0.0
    %441 = vmatprep.subr.mxu0 0.0
    %442 = vmatpush1.msra.mxu0 0.0
    %443 = vmatprep.subr.mxu0 0.0
    %444 = vmatpush1.msra.mxu0 0.0
    %445 = vmatprep.subr.mxu0 0.0
    %446 = vmatpush1.msra.mxu0 0.0
    %447 = vmatprep.subr.mxu0 0.0
    %448 = vmatpush1.msra.mxu0 0.0
    %449 = vmatprep.subr.mxu0 0.0
    %450 = vmatpush1.msra.mxu0 0.0
    %451 = vmatprep.subr.mxu0 0.0
    %452 = vmatpush1.msra.mxu0 0.0
    %453 = vmatprep.subr.mxu0 0.0
    %454 = vmatpush1.msra.mxu0 0.0
    %455 = vmatprep.subr.mxu0 0.0
    %456 = vmatpush1.msra.mxu0 0.0
    %457 = vmatprep.subr.mxu0 0.0
    %458 = vmatpush1.msra.mxu0 0.0
    %459 = vmatprep.subr.mxu0 0.0
    %460 = vmatpush1.msra.mxu0 0.0
    %461 = vmatprep.mubr.f32.mxu0 0.0
    %462 = vmatmul.mubr.f32.gmra.mrb[0].mxu0 %v378
    %v463 = vpop.f32.mrb[0].mxu0
    %v464 = vadd.f32 0.0, %v463
    %v465 = vpop.f32.mrb[0].mxu0
    %466 = vmatprep.mubr.f32.mxu0 0.0
    %467 = vmatmul.mubr.f32.gmra.mrb[0].mxu0 %v379
    %v468 = vpop.f32.mrb[0].mxu0
    %v469 = vadd.f32 0.0, %v468
    %v470 = vpop.f32.mrb[0].mxu0
    %471 = vdwg.mxu0
    %v472 = vadd.f32 %v289, %v464
    %v473 = vadd.f32 %v294, %v469
    %v474 = vld [vmem:[%s4] sm:$0x1]
    %v476 = vlaneseq
    %v477 = vshrl.u32 %v476, 7
    %v478 = vsub.s32 0, %v477
    %v479 = vrot.slane %v474, %v478
    %v481 = vadd.f32 %v472, %v479
    %v482 = vadd.f32 %v473, %v479
    %483 = vmatprep.subr.mxu0 0.0
    %484 = vmatpush1.msra.mxu0 %v481
    %485 = vmatprep.subr.mxu0 0.0
    %486 = vmatpush1.msra.mxu0 %v482
    %487 = vmatprep.subr.mxu0 0.0
    %488 = vmatpush1.msra.mxu0 0.0
    %489 = vmatprep.subr.mxu0 0.0
    %490 = vmatpush1.msra.mxu0 0.0
    %491 = vmatprep.subr.mxu0 0.0
    %492 = vmatpush1.msra.mxu0 0.0
    %493 = vmatprep.subr.mxu0 0.0
    %494 = vmatpush1.msra.mxu0 0.0
    %495 = vmatprep.subr.mxu0 0.0
    %496 = vmatpush1.msra.mxu0 0.0
    %497 = vmatprep.subr.mxu0 0.0
    %498 = vmatpush1.msra.mxu0 0.0
    %499 = vmatprep.subr.mxu0 0.0
    %500 = vmatpush1.msra.mxu0 0.0
    %501 = vmatprep.subr.mxu0 0.0
    %502 = vmatpush1.msra.mxu0 0.0
    %503 = vmatprep.subr.mxu0 0.0
    %504 = vmatpush1.msra.mxu0 0.0
    %505 = vmatprep.subr.mxu0 0.0
    %506 = vmatpush1.msra.mxu0 0.0
    %507 = vmatprep.subr.mxu0 0.0
    %508 = vmatpush1.msra.mxu0 0.0
    %509 = vmatprep.subr.mxu0 0.0
    %510 = vmatpush1.msra.mxu0 0.0
    %511 = vmatprep.subr.mxu0 0.0
    %512 = vmatpush1.msra.mxu0 0.0
    %513 = vmatprep.subr.mxu0 0.0
    %514 = vmatpush1.msra.mxu0 0.0
    %515 = vmatprep.subr.mxu0 0.0
    %516 = vmatpush1.msra.mxu0 0.0
    %517 = vmatprep.subr.mxu0 0.0
    %518 = vmatpush1.msra.mxu0 0.0
    %519 = vmatprep.subr.mxu0 0.0
    %520 = vmatpush1.msra.mxu0 0.0
    %521 = vmatprep.subr.mxu0 0.0
    %522 = vmatpush1.msra.mxu0 0.0
    %523 = vmatprep.subr.mxu0 0.0
    %524 = vmatpush1.msra.mxu0 0.0
    %525 = vmatprep.subr.mxu0 0.0
    %526 = vmatpush1.msra.mxu0 0.0
    %527 = vmatprep.subr.mxu0 0.0
    %528 = vmatpush1.msra.mxu0 0.0
    %529 = vmatprep.subr.mxu0 0.0
    %530 = vmatpush1.msra.mxu0 0.0
    %531 = vmatprep.subr.mxu0 0.0
    %532 = vmatpush1.msra.mxu0 0.0
    %533 = vmatprep.subr.mxu0 0.0
    %534 = vmatpush1.msra.mxu0 0.0
    %535 = vmatprep.subr.mxu0 0.0
    %536 = vmatpush1.msra.mxu0 0.0
    %537 = vmatprep.subr.mxu0 0.0
    %538 = vmatpush1.msra.mxu0 0.0
    %539 = vmatprep.subr.mxu0 0.0
    %540 = vmatpush1.msra.mxu0 0.0
    %541 = vmatprep.subr.mxu0 0.0
    %542 = vmatpush1.msra.mxu0 0.0
    %543 = vmatprep.subr.mxu0 0.0
    %544 = vmatpush1.msra.mxu0 0.0
    %545 = vmatprep.subr.mxu0 0.0
    %546 = vmatpush1.msra.mxu0 0.0
    %547 = vmatprep.mubr.f32.mxu0 0.0
    %548 = vmatmul.mubr.f32.gmra.mrb[0].mxu0 %v45
    %v549 = vpop.f32.mrb[0].mxu0
    %v550 = vadd.f32 0.0, %v549
    %v551 = vpop.f32.mrb[0].mxu0
    %552 = vmatprep.mubr.f32.mxu0 0.0
    %553 = vmatmul.mubr.f32.gmra.mrb[0].mxu0 %v48
    %v554 = vpop.f32.mrb[0].mxu0
    %v555 = vadd.f32 0.0, %v554
    %v556 = vpop.f32.mrb[0].mxu0
    %557 = vdwg.mxu0
    %558 = vst [vmem:[#allocation3] sm:$0xff] %v550
    %559 = vst [vmem:[#allocation3 + $0x8] sm:$0xff] %v555
    // Predicated region
    $region22: #{gcn_aisummer_forward.1} parent=1 // pred_check
      _
    $region23: #{gcn_aisummer_forward.1} parent=1 // pred_check_branch
      %561 = sbr.rel (0) target = $region25
    $region24: #{gcn_aisummer_forward.1} parent=1 // pred_region
      %s563 = ssub.s32 256, 256
      %564 = vsyncadd [#allocation4], %s563
      %s565 = sshll.u32 [#allocation3], 4
      %s566 = int_to_ptr.vmem [resolvable:$true] %s565
      %571 = dma.vmem_to_hbm [thread:$0]  %s566, 256, %s5, [#allocation4], 128, 128, 8
    $region25: #{gcn_aisummer_forward.1} parent=1 // pred_fallthru
      _
    // Predicated region
    $region26: #{gcn_aisummer_forward.1} parent=1 // pred_check
      _
    $region27: #{gcn_aisummer_forward.1} parent=1 // pred_check_branch
      %573 = sbr.rel (0) target = $region29
    $region28: #{gcn_aisummer_forward.1} parent=1 // pred_region
      %574 = dma.done [#allocation4], 256
    $region29: #{gcn_aisummer_forward.1} parent=1 // pred_fallthru
      _
    %575 = vsyncpa [#allocation4], 1

</llo_original>
